<compile_context>
chip_gen: v5e
topology: v5e:2x2
jax: 0.10.0
libtpu: 0.0.40
codegen_flags: <defaults>
</compile_context>

<pallas_src>
import functools

import jax
import jax.numpy as jnp
from jax.experimental import pallas as pl
from jax.experimental.pallas import tpu as pltpu


# ----------------------------------------------------------------------------
# Kernel 1: sigmoid + clamp + separable 3x3 max-pool NMS (peak suppression)
# ----------------------------------------------------------------------------
def _nms_kernel(hm_ref, out_ref):
    blk = hm_ref[...]                                 # (1, TC, H, W), native dtype
    _, tc, H, W = blk.shape
    n = tc * H
    # Fold channels onto the sublane axis so every shift is a plain 2-D sublane/lane
    # rotation through the (otherwise idle) XLU instead of concat-based VMEM copies.
    x = blk.reshape(n, W).astype(jnp.float32)
    s = jnp.clip(jax.nn.sigmoid(x), 1e-4, 1.0 - 1e-4)  # torch _sigmoid clamp

    # NOTE: zero border fill is only valid because s >= 1e-4 > 0 (equivalent to the
    #       -inf padding of F.max_pool2d for strictly-positive inputs).
    row = jax.lax.broadcasted_iota(jnp.int32, (n, W), 0) % H   # row index within a channel
    col = jax.lax.broadcasted_iota(jnp.int32, (n, W), 1)

    # Separable 3x3 max (stride 1, pad 1): max over dh first, then dw — 4 rolls total.
    # The row mask also kills cross-channel contamination at channel boundaries.
    dn = jnp.where(row < H - 1, pltpu.roll(s, shift=n - 1, axis=0), 0.0)   # s[h+1, w]
    up = jnp.where(row > 0,     pltpu.roll(s, shift=1,     axis=0), 0.0)   # s[h-1, w]
    vmax = jnp.maximum(s, jnp.maximum(dn, up))
    rt = jnp.where(col < W - 1, pltpu.roll(vmax, shift=W - 1, axis=1), 0.0)  # [:, w+1]
    lt = jnp.where(col > 0,     pltpu.roll(vmax, shift=1,     axis=1), 0.0)  # [:, w-1]
    hmax = jnp.maximum(vmax, jnp.maximum(rt, lt))

    keep = (hmax == s).astype(s.dtype)                # peak mask (plateau ties kept, same as torch)
    out_ref[...] = (s * keep).reshape(1, tc, H, W)


def nms_heatmap(hm, *, tc=None):
    """sigmoid + clamp + 3x3 max-pool peak suppression. `hm` passed in its native dtype."""
    B, C, H, W = hm.shape
    if tc is None:
        tc = 1
        for cand in (8, 4, 2, 1):        # channel tile keeps double-buffered blocks small
            if C % cand == 0:
                tc = cand
                break
    return pl.pallas_call(
        _nms_kernel,
        out_shape=jax.ShapeDtypeStruct((B, C, H, W), jnp.float32),
        grid_spec=pltpu.PrefetchScalarGridSpec(
            num_scalar_prefetch=0,
            grid=(B, C // tc),
            in_specs=[pl.BlockSpec((1, tc, H, W), lambda b, c: (b, c, 0, 0))],
            out_specs=pl.BlockSpec((1, tc, H, W), lambda b, c: (b, c, 0, 0)),
        ),
        compiler_params=pltpu.CompilerParams(
            dimension_semantics=("parallel", "parallel")),
    )(hm)


# ----------------------------------------------------------------------------
# Kernel 2: fused one-hot gather (single MXU matmul per HW tile, K on lanes)
#           + bbox decode + inverse affine transform, packed lane-dense output.
# ----------------------------------------------------------------------------
_NUM_OUT_ROWS = 8    # x1, y1, x2, y2, trk_x, trk_y, pre_x, pre_y
_NUM_HEAD_ROWS = 6   # reg_x, reg_y, wh_x, wh_y, tr_x, tr_y


def _decode_kernel(ind_ref, reg_ref, wh_ref, tr_ref, prm_ref, out_ref, acc_ref,
                   *, H, W, HW, THW):
    b = pl.program_id(0)
    h = pl.program_id(1)

    @pl.when(h == 0)
    def _init():
        acc_ref[...] = jnp.zeros_like(acc_ref)

    Kp = acc_ref.shape[-1]
    ind = ind_ref[pl.ds(b, 1), :]                          # (1, Kp) int32 spatial idx (y*W + x)

    # Assemble the (6, THW) fused-head operand in VMEM (no wrapper-side HBM temp).
    lhs = jnp.concatenate([reg_ref[0], wh_ref[0], tr_ref[0]],
                          axis=0).astype(jnp.float32)      # (6, THW)
    if HW % THW != 0:
        # Last tile reads past HW: zero the OOB columns so garbage (possibly NaN/Inf)
        # cannot leak through 0 * onehot.
        pos = jax.lax.broadcasted_iota(jnp.int32, (1, THW), 1) + h * THW
        lhs = jnp.where(pos < HW, lhs, 0.0)

    # Fused gather: (6, THW) @ (THW, Kp) -> (6, Kp) partial sum, K on the lane axis.
    hw = jax.lax.broadcasted_iota(jnp.int32, (THW, Kp), 0) + h * THW
    onehot = (hw == ind).astype(jnp.float32)               # (THW, Kp), exact 0/1
    acc_ref[...] += jnp.dot(lhs, onehot, preferred_element_type=jnp.float32)

    @pl.when(h == pl.num_programs(1) - 1)
    def _finalize():
        g = acc_ref[...]                                   # (6, Kp) gathered head values
        xs0 = (ind % W).astype(jnp.float32)                # (1, Kp) integer center x
        ys0 = (ind // W).astype(jnp.float32)               # (1, Kp) integer center y
        xs = xs0 + g[0:1, :]
        ys = ys0 + g[1:2, :]
        wh_x = g[2:3, :]
        wh_y = g[3:4, :]
        tr_x = g[4:5, :]
        tr_y = g[5:6, :]

        prow = prm_ref[pl.ds(b, 1), :]                     # (1, 4): cx, cy, scale, 0
        cx = prow[:, 0:1]
        cy = prow[:, 1:2]
        sc = prow[:, 2:3]

        # inverse affine (get_affine_transform(c, s, 0, (W, H), inv=1)):
        #   x_img = c_x + (x_feat - W/2) * s / W ; y_img = c_y + (y_feat - H/2) * s / W
        def tx(v):
            return cx + (v - W * 0.5) * sc

        def ty(v):
            return cy + (v - H * 0.5) * sc

        ctx = tx(xs0)
        cty = ty(ys0)
        ptx = tx(xs0 + tr_x)
        pty = ty(ys0 + tr_y)

        # Lane-dense (8, Kp) output slab: x1, y1, x2, y2, trk_x, trk_y, pre_x, pre_y.
        # TODO(synk): pre_cts assumed to be transform(ct + tracking); exact P3AFormer
        #             head semantics may differ.
        out_ref[0] = jnp.concatenate(
            [tx(xs - wh_x * 0.5), ty(ys - wh_y * 0.5),
             tx(xs + wh_x * 0.5), ty(ys + wh_y * 0.5),
             ptx - ctx, pty - cty,
             ptx, pty], axis=0)


def decode_detections(spat_idx, reg, wh, tracking, prm, H, W, *, hw_tile_cap=2048):
    """spat_idx: (B, K) int32; reg/wh/tracking: (B, 2, HW) f32; prm: (B, 4) f32 -> (B, 8, K)."""
    B, K = spat_idx.shape
    HW = H * W

    # Lane-dense output: pad K up to a multiple of 128 (unmasked vst on the output slab).
    # Padded lanes carry index -1, which matches no location -> gathered zeros; sliced off.
    Kp = max(128, ((K + 127) // 128) * 128)
    if Kp != K:
        spat_idx = jnp.pad(spat_idx, ((0, 0), (0, Kp - K)), constant_values=-1)

    thw = HW if HW <= hw_tile_cap else hw_tile_cap          # cap is a multiple of 128
    n_hw = pl.cdiv(HW, thw)

    kern = functools.partial(_decode_kernel, H=H, W=W, HW=HW, THW=thw)
    packed = pl.pallas_call(
        kern,
        out_shape=jax.ShapeDtypeStruct((B, _NUM_OUT_ROWS, Kp), jnp.float32),
        grid_spec=pltpu.PrefetchScalarGridSpec(
            num_scalar_prefetch=0,
            grid=(B, n_hw),
            in_specs=[
                pl.BlockSpec((B, Kp), lambda b, h: (0, 0)),            # indices, VMEM-resident
                pl.BlockSpec((1, 2, thw), lambda b, h: (b, 0, h)),     # reg tile
                pl.BlockSpec((1, 2, thw), lambda b, h: (b, 0, h)),     # wh tile
                pl.BlockSpec((1, 2, thw), lambda b, h: (b, 0, h)),     # tracking tile
                pl.BlockSpec((B, 4), lambda b, h: (0, 0)),             # affine params
            ],
            out_specs=pl.BlockSpec((1, _NUM_OUT_ROWS, Kp), lambda b, h: (b, 0, 0)),
            scratch_shapes=[pltpu.VMEM((_NUM_HEAD_ROWS, Kp), jnp.float32)],
        ),
        compiler_params=pltpu.CompilerParams(
            dimension_semantics=("parallel", "arbitrary")),
    )(spat_idx.astype(jnp.int32), reg, wh, tracking, prm)
    return packed[:, :, :K]


# ----------------------------------------------------------------------------
# PostProcess.forward equivalent
# ----------------------------------------------------------------------------
def post_process(hm, reg, wh, tracking, target_sizes, *, K, valid_ids, out_thresh):
    """Inputs are the last-layer maps (the torch code's v[-1] for each head)."""
    B, C, H, W = hm.shape
    HW = H * W

    # 1) sigmoid + NMS (Pallas kernel 1), native input dtype, f32 suppressed heatmap out.
    heat = nms_heatmap(hm)

    # 2) top-K over all classes/locations.
    # TODO(synk): top-K stays in XLA (jax.lax.top_k); fusing a per-tile candidate
    #             reduction into kernel 1 would avoid re-reading the heatmap from HBM.
    scores, inds = jax.lax.top_k(heat.reshape(B, C * HW), K)     # sorted descending
    clses = inds // HW
    spat = (inds % HW).astype(jnp.int32)

    # per-batch affine params: c = (W_img/2, H_img/2), s = max(H_img, W_img)
    th = target_sizes[:, 0].astype(jnp.float32)
    tw = target_sizes[:, 1].astype(jnp.float32)
    prm = jnp.stack([tw * 0.5, th * 0.5, jnp.maximum(th, tw) / float(W),
                     jnp.zeros_like(th)], axis=1)                # (B, 4)

    # 3) gather + decode + inverse affine (Pallas kernel 2), packed (B, 8, K).
    #    reg/wh/tracking are reshaped views (no copy) and fused inside the kernel.
    packed = decode_detections(
        spat,
        reg.reshape(B, 2, HW).astype(jnp.float32),
        wh.reshape(B, 2, HW).astype(jnp.float32),
        tracking.reshape(B, 2, HW).astype(jnp.float32),
        prm, H, W)
    dec = jnp.transpose(packed, (0, 2, 1))                       # (B, K, 8) — tiny, wrapper-side
    boxes = dec[:, :, 0:4]
    trk = dec[:, :, 4:6]
    pre_cts = dec[:, :, 6:8]

    labels = jnp.asarray(valid_ids, jnp.int32)[clses]            # valid_ids[class - 1]
    keep = scores >= out_thresh                                  # torch: break on score < thresh

    return {
        "scores": scores,        # (B, K) f32
        "labels": labels,        # (B, K) i32
        "boxes": boxes,          # (B, K, 4) f32, image coordinates (x1, y1, x2, y2)
        "tracking": trk,         # (B, K, 2) f32, displacement in image coordinates
        "pre_cts": pre_cts,      # (B, K, 2) f32
        "keep": keep,            # (B, K) bool -- valid-detection mask (fixed-K, no list trimming)
    }


if __name__ == "__main__":
    B, C, H, W, K = 2, 4, 16, 16, 8

    key = jax.random.PRNGKey(0)
    k1, k2, k3, k4 = jax.random.split(key, 4)
    hm = jax.random.normal(k1, (B, C, H, W), jnp.float32)          # class heatmap logits
    reg = jax.random.uniform(k2, (B, 2, H, W), jnp.float32)        # center offset head
    wh = jax.random.uniform(k3, (B, 2, H, W), jnp.float32) * 4.0   # width/height head
    tracking = jax.random.normal(k4, (B, 2, H, W), jnp.float32)    # tracking offset head
    target_sizes = jnp.array([[480, 640], [360, 540]], jnp.int32)  # (H_img, W_img) per image

    out = post_process(
        hm, reg, wh, tracking, target_sizes,
        K=K, valid_ids=(1, 2, 3, 4), out_thresh=0.1,
    )
    out = jax.tree_util.tree_map(jax.block_until_ready, out)
    print("KERNEL_OK")
</pallas_src>

<mosaic_0001>
module attributes {stable_mosaic.version = 11 : i64} {
  func.func @_nms_kernel(%arg0: i32, %arg1: i32, %arg2: memref<1x4x16x16xf32, #tpu.memory_space<vmem>>, %arg3: memref<1x4x16x16xf32, #tpu.memory_space<vmem>>) attributes {dimension_semantics = [#tpu.dimension_semantics<parallel>, #tpu.dimension_semantics<parallel>], iteration_bounds = array<i64: 2, 1>, scalar_prefetch = 0 : i64, scratch_operands = 0 : i64, tpu.core_type = #tpu.core_type<tc>, window_params = [{transform_indices = @transform_0, window_bounds = array<i64: 1, 4, 16, 16>}, {transform_indices = @transform_1, window_bounds = array<i64: 1, 4, 16, 16>}]} {
    %c0 = arith.constant 0 : index
    %c0_0 = arith.constant 0 : index
    %c0_1 = arith.constant 0 : index
    %c0_2 = arith.constant 0 : index
    %0 = vector.load %arg2[%c0, %c0_0, %c0_1, %c0_2] : memref<1x4x16x16xf32, #tpu.memory_space<vmem>>, vector<1x4x16x16xf32>
    %1 = vector.shape_cast %0 : vector<1x4x16x16xf32> to vector<64x16xf32>
    %2 = arith.negf %1 : vector<64x16xf32>
    %3 = math.exp %2 : vector<64x16xf32>
    %cst = arith.constant 1.000000e+00 : f32
    %4 = vector.broadcast %cst : f32 to vector<64x16xf32>
    %5 = arith.addf %4, %3 : vector<64x16xf32>
    %6 = arith.divf %4, %5 : vector<64x16xf32>
    %cst_3 = arith.constant 9.99999974E-5 : f32
    %cst_4 = arith.constant 0.999899983 : f32
    %7 = vector.broadcast %cst_3 : f32 to vector<64x16xf32>
    %8 = arith.maximumf %7, %6 : vector<64x16xf32>
    %9 = vector.broadcast %cst_4 : f32 to vector<64x16xf32>
    %10 = arith.minimumf %9, %8 : vector<64x16xf32>
    %11 = tpu.iota {dimensions = array<i32: 0>} : vector<64x16xi32>
    %c16_i32 = arith.constant 16 : i32
    %c0_i32 = arith.constant 0 : i32
    %12 = arith.cmpi eq, %c16_i32, %c0_i32 : i32
    %c1_i32 = arith.constant 1 : i32
    %13 = arith.select %12, %c1_i32, %c16_i32 : i32
    %14 = vector.broadcast %13 : i32 to vector<64x16xi32>
    %15 = arith.remsi %11, %14 : vector<64x16xi32>
    %c0_i32_5 = arith.constant 0 : i32
    %16 = vector.broadcast %c0_i32_5 : i32 to vector<64x16xi32>
    %17 = arith.cmpi ne, %15, %16 : vector<64x16xi32>
    %c0_i32_6 = arith.constant 0 : i32
    %18 = vector.broadcast %c0_i32_6 : i32 to vector<64x16xi32>
    %19 = arith.cmpi slt, %15, %18 : vector<64x16xi32>
    %c0_i32_7 = arith.constant 0 : i32
    %20 = arith.cmpi slt, %13, %c0_i32_7 : i32
    %21 = vector.broadcast %20 : i1 to vector<64x16xi1>
    %22 = vector.broadcast %21 : vector<64x16xi1> to vector<64x16xi1>
    %23 = arith.xori %19, %22 : vector<64x16xi1>
    %24 = arith.andi %23, %17 : vector<64x16xi1>
    %25 = vector.broadcast %13 : i32 to vector<64x16xi32>
    %26 = arith.addi %15, %25 : vector<64x16xi32>
    %27 = arith.select %24, %26, %15 : vector<64x16xi1>, vector<64x16xi32>
    %28 = tpu.iota {dimensions = array<i32: 1>} : vector<64x16xi32>
    %c15_i32 = arith.constant 15 : i32
    %29 = vector.broadcast %c15_i32 : i32 to vector<64x16xi32>
    %30 = arith.cmpi slt, %27, %29 : vector<64x16xi32>
    %c63_i32 = arith.constant 63 : i32
    %31 = tpu.dynamic_rotate %10 by %c63_i32 dim 0 : vector<64x16xf32>, i32 -> vector<64x16xf32>
    %cst_8 = arith.constant 0.000000e+00 : f32
    %32 = vector.broadcast %cst_8 : f32 to vector<64x16xf32>
    %33 = arith.select %30, %31, %32 : vector<64x16xi1>, vector<64x16xf32>
    %c0_i32_9 = arith.constant 0 : i32
    %34 = vector.broadcast %c0_i32_9 : i32 to vector<64x16xi32>
    %35 = arith.cmpi sgt, %27, %34 : vector<64x16xi32>
    %c1_i32_10 = arith.constant 1 : i32
    %36 = tpu.dynamic_rotate %10 by %c1_i32_10 dim 0 : vector<64x16xf32>, i32 -> vector<64x16xf32>
    %cst_11 = arith.constant 0.000000e+00 : f32
    %37 = vector.broadcast %cst_11 : f32 to vector<64x16xf32>
    %38 = arith.select %35, %36, %37 : vector<64x16xi1>, vector<64x16xf32>
    %39 = arith.maximumf %33, %38 : vector<64x16xf32>
    %40 = arith.maximumf %10, %39 : vector<64x16xf32>
    %c15_i32_12 = arith.constant 15 : i32
    %41 = vector.broadcast %c15_i32_12 : i32 to vector<64x16xi32>
    %42 = arith.cmpi slt, %28, %41 : vector<64x16xi32>
    %c15_i32_13 = arith.constant 15 : i32
    %43 = tpu.dynamic_rotate %40 by %c15_i32_13 dim 1 : vector<64x16xf32>, i32 -> vector<64x16xf32>
    %cst_14 = arith.constant 0.000000e+00 : f32
    %44 = vector.broadcast %cst_14 : f32 to vector<64x16xf32>
    %45 = arith.select %42, %43, %44 : vector<64x16xi1>, vector<64x16xf32>
    %c0_i32_15 = arith.constant 0 : i32
    %46 = vector.broadcast %c0_i32_15 : i32 to vector<64x16xi32>
    %47 = arith.cmpi sgt, %28, %46 : vector<64x16xi32>
    %c1_i32_16 = arith.constant 1 : i32
    %48 = tpu.dynamic_rotate %40 by %c1_i32_16 dim 1 : vector<64x16xf32>, i32 -> vector<64x16xf32>
    %cst_17 = arith.constant 0.000000e+00 : f32
    %49 = vector.broadcast %cst_17 : f32 to vector<64x16xf32>
    %50 = arith.select %47, %48, %49 : vector<64x16xi1>, vector<64x16xf32>
    %51 = arith.maximumf %45, %50 : vector<64x16xf32>
    %52 = arith.maximumf %40, %51 : vector<64x16xf32>
    %53 = arith.cmpf oeq, %52, %10 : vector<64x16xf32>
    %54 = arith.extui %53 : vector<64x16xi1> to vector<64x16xi32>
    %55 = arith.sitofp %54 : vector<64x16xi32> to vector<64x16xf32>
    %56 = arith.mulf %10, %55 : vector<64x16xf32>
    %57 = vector.shape_cast %56 : vector<64x16xf32> to vector<1x4x16x16xf32>
    %c0_18 = arith.constant 0 : index
    %c0_19 = arith.constant 0 : index
    %c0_20 = arith.constant 0 : index
    %c0_21 = arith.constant 0 : index
    %58 = vector.load %arg3[%c0_18, %c0_19, %c0_20, %c0_21] : memref<1x4x16x16xf32, #tpu.memory_space<vmem>>, vector<1x4x16x16xf32>
    tpu.vector_store %arg3[%c0_18, %c0_19, %c0_20, %c0_21], %57 {strides = array<i32>} : memref<1x4x16x16xf32, #tpu.memory_space<vmem>>, vector<1x4x16x16xf32>,
    return
  }
  func.func @transform_0(%arg0: i32, %arg1: i32) -> (i32, i32, i32, i32) {
    %c0_i32 = arith.constant 0 : i32
    %c0_i32_0 = arith.constant 0 : i32
    %c0_i32_1 = arith.constant 0 : i32
    return %arg0, %arg1, %c0_i32, %c0_i32_0 : i32, i32, i32, i32
  }
  func.func @transform_1(%arg0: i32, %arg1: i32) -> (i32, i32, i32, i32) {
    %c0_i32 = arith.constant 0 : i32
    %c0_i32_0 = arith.constant 0 : i32
    %c0_i32_1 = arith.constant 0 : i32
    return %arg0, %arg1, %c0_i32, %c0_i32_0 : i32, i32, i32, i32
  }
}

</mosaic_0001>

<llo_original>
// kernel: tpu_custom_call.1
$region0: #{tpu_custom_call.1}
  #allocation0 [shape = 'u32[]', space=smem, size = 0x4, offset = 0x4, fixed_abs, tag = 'smem constant byte address 0x4 - core index']
  #allocation1 [shape = 'u32[72,128]{1,0:T(1,128)}', space=vmem, size = 0x9000, scoped, tag = 'internal scratch']
  %s0 = inlined_call_operand.hbm [shape: f32[2,4,16,16], index: 0, kind: input, shape index: {}]
  %s1 = inlined_call_operand.hbm [shape: f32[2,4,16,16], index: 1, kind: output, shape index: {}]
  %s2 = sld [smem:[#allocation0]]
  $region41: #{tpu_custom_call.1} parent=0
    _
  %s4 = ssub.s32 1, %s2
  %s5 = scalar_select 0, %s4, %s2
  $region1: #{tpu_custom_call.1} parent=0
    #allocation2 [shape = 'u8[65536]{0}', space=vmem, size = 0x10000, scoped, tag = 'input window, operand 0']
    #allocation3 [shape = 's32[2]{0}', space=sflag, size = 0x8, scoped, tag = 'scoped memory for tpu_custom_call.1']
    #allocation4 [shape = 's32[2]{0}', space=sflag, size = 0x8, scoped, tag = 'scoped memory for tpu_custom_call.1']
    #allocation5 [shape = 'u8[65536]{0}', space=vmem, size = 0x10000, scoped, tag = 'output window, operand 0']
    %6 = vsyncpa [#allocation3], 0
    %s7 = scalar_lea.sflag [#allocation3], 1
    %8 = vsyncpa %s7, 0
    %9 = vsyncpa [#allocation4], 0
    %s10 = scalar_lea.sflag [#allocation4], 1
    %11 = vsyncpa %s10, 0
    loop: start=0, step=1, limit=4
    $region2: #{tpu_custom_call.1} parent=1 // loop_pre_header
      _
    $region3: #{tpu_custom_call.1} parent=1 // loop_header
      %s13 = sphi 0, %s17
      %p14 = scmp.ge.s32.totalorder %s13, 4
      %s20 = sphi 0, %s32
      %s21 = sphi 0, %s28
      %s22 = sphi 0, %s20
      %s23 = sphi 0, %s21
      %s24 = sphi 0, %s22
      %s25 = sphi 0, %s23
      %s37 = sphi 0, %s39
      %s40 = sphi 0, %s37
      %s41 = sphi 0, %s40
      %s57 = sphi 0, %s41
      %s65 = sphi 0, %s67
      %s68 = sphi 0, %s65
      %s69 = sphi 0, %s68
      %s85 = sphi 0, %s69
    $region4: #{tpu_custom_call.1} parent=1 // loop_header_branch
      %16 = sbr.rel (%p14) target = $region8
    $region5: #{tpu_custom_call.1} parent=1 // loop_body
      %s18 = ssub.s32 %s13, 1
      %s19 = ssub.s32 %s13, 2
      %s26 = sadd.s32 1, %s21
      %p27 = scmp.ge.s32.totalorder %s26, 1
      %s28 = scalar_select %p27, 0, %s26
      %s29 = sadd.s32 1, %s20
      %s30 = scalar_select %p27, %s29, %s20
      %p31 = scmp.ge.s32.totalorder %s30, 2
      %s32 = scalar_select %p31, 0, %s30
      %s33 = ssub.s32 %s20, %s32
      %s34 = ssub.s32 %s21, %s28
      %s35 = sor.u32 %s33, %s34
      %p36 = scmp.eq.s32.totalorder %s35, 0
      %s38 = sadd.s32 %s37, 1
      %s39 = scalar_select %p36, %s37, %s38
      %p42 = pneg %p36
      %p43 = scmp.eq.s32.totalorder %s13, 1
      %p44 = por %p42, %p43
      %p45 = scmp.ne.s32.totalorder %s37, %s40
      %p46 = scmp.eq.s32.totalorder %s13, 0
      %p47 = por %p45, %p46
      %p48 = scmp.ne.s32.totalorder %s37, %s40
      %p49 = scmp.eq.s32.totalorder %s18, 1
      %p50 = por %p48, %p49
      %p51 = scmp.ne.s32.totalorder %s40, %s41
      %p52 = scmp.eq.s32.totalorder %s18, 0
      %p53 = por %p51, %p52
      %p54 = scmp.ne.s32.totalorder %s40, %s41
      %p55 = scmp.eq.s32.totalorder %s19, 1
      %p56 = por %p54, %p55
      %p58 = scmp.ne.s32.totalorder %s41, %s57
      %p59 = scmp.eq.s32.totalorder %s19, 0
      %p60 = por %p58, %p59
      %s61 = ssub.s32 %s20, %s32
      %s62 = ssub.s32 %s21, %s28
      %s63 = sor.u32 %s61, %s62
      %p64 = scmp.eq.s32.totalorder %s63, 0
      %s66 = sadd.s32 %s65, 1
      %s67 = scalar_select %p64, %s65, %s66
      %p70 = pneg %p64
      %p71 = scmp.eq.s32.totalorder %s13, 1
      %p72 = por %p70, %p71
      %p73 = scmp.ne.s32.totalorder %s65, %s68
      %p74 = scmp.eq.s32.totalorder %s13, 0
      %p75 = por %p73, %p74
      %p76 = scmp.ne.s32.totalorder %s65, %s68
      %p77 = scmp.eq.s32.totalorder %s18, 1
      %p78 = por %p76, %p77
      %p79 = scmp.ne.s32.totalorder %s68, %s69
      %p80 = scmp.eq.s32.totalorder %s18, 0
      %p81 = por %p79, %p80
      %p82 = scmp.ne.s32.totalorder %s68, %s69
      %p83 = scmp.eq.s32.totalorder %s19, 1
      %p84 = por %p82, %p83
      %p86 = scmp.ne.s32.totalorder %s69, %s85
      %p87 = scmp.eq.s32.totalorder %s19, 0
      %p88 = por %p86, %p87
      %p89 = scmp.le.s32.totalorder 1, %s13
      %p90 = scmp.lt.s32.totalorder %s13, 3
      %p91 = pnand %p89, %p90
      %p92 = pneg %p91
      // Predicated region
      $region9: #{tpu_custom_call.1} parent=5 // pred_check
        _
      $region10: #{tpu_custom_call.1} parent=5 // pred_check_branch
        %94 = sbr.rel (%p91) target = $region12
      $region11: #{tpu_custom_call.1} parent=5 // pred_region
        %s95 = ssub.s32 %s13, 1
      $region12: #{tpu_custom_call.1} parent=5 // pred_fallthru
        _
      %p96 = scmp.lt.s32.totalorder %s13, 2
      // Predicated region
      $region13: #{tpu_custom_call.1} parent=5 // pred_check
        %p97 = pneg %p96
      $region14: #{tpu_custom_call.1} parent=5 // pred_check_branch
        %99 = sbr.rel (%p97) target = $region16
      $region15: #{tpu_custom_call.1} parent=5 // pred_region
        // Predicated region
        $region17: #{tpu_custom_call.1} parent=15 // pred_check
          %p100 = pneg %p47
        $region18: #{tpu_custom_call.1} parent=15 // pred_check_branch
          %102 = sbr.rel (%p100) target = $region20
        $region19: #{tpu_custom_call.1} parent=15 // pred_region
          %s103 = sand.u32 %s37, 1
          %s104 = scalar_lea.sflag [#allocation3], %s103
          %s105 = sand.u32 %s37, 1
          %s106 = smul.addr %s105, 64
          %s107 = scalar_lea.vmem [#allocation2], %s106
          %s108 = smul.u32 4, %s21
          %110 = vsyncadd %s104, 0
          %s111 = smul.addr %s108, 2
          %s112 = smul.addr %s20, 8
          %s113 = sadd.s32 %s111, %s112
          %s114 = smul.addr %s113, 8
          %s115 = scalar_lea.hbm %s0, %s114
          %s116 = sshll.u32 %s115, 4
          %s117 = int_to_ptr.hbm [resolvable:$true] %s116
          %s118 = sshll.u32 %s107, 4
          %s119 = int_to_ptr.vmem [resolvable:$true] %s118
          %124 = dma.hbm_to_vmem [thread:$0]  %s117, 1024, %s119, %s104, 128, 128, 8
        $region20: #{tpu_custom_call.1} parent=15 // pred_fallthru
          _
      $region16: #{tpu_custom_call.1} parent=5 // pred_fallthru
        _
      %p125 = scmp.le.s32.totalorder 1, %s13
      %p126 = scmp.lt.s32.totalorder %s13, 3
      %p127 = pnand %p125, %p126
      %p128 = pneg %p127
      // Predicated region
      $region21: #{tpu_custom_call.1} parent=5 // pred_check
        _
      $region22: #{tpu_custom_call.1} parent=5 // pred_check_branch
        %130 = sbr.rel (%p127) target = $region24
      $region23: #{tpu_custom_call.1} parent=5 // pred_region
        %s131 = ssub.s32 %s13, 1
        %s132 = sand.u32 %s40, 1
        %s133 = scalar_lea.sflag [#allocation3], %s132
        %s134 = sand.u32 %s40, 1
        %s135 = smul.addr %s134, 64
        %s136 = scalar_lea.vmem [#allocation2], %s135
        // Predicated region
        $region25: #{tpu_custom_call.1} parent=23 // pred_check
          %p137 = pneg %p53
        $region26: #{tpu_custom_call.1} parent=23 // pred_check_branch
          %139 = sbr.rel (%p137) target = $region28
        $region27: #{tpu_custom_call.1} parent=23 // pred_region
          %141 = dma.done %s133, 1024
        $region28: #{tpu_custom_call.1} parent=23 // pred_fallthru
          _
        %s142 = sand.u32 %s40, 1
        %s143 = scalar_lea.sflag [#allocation3], %s142
        %s144 = sand.u32 %s40, 1
        %s145 = smul.addr %s144, 64
        %s146 = scalar_lea.vmem [#allocation2], %s145
        %p147 = pneg %p53
        %p148 = pneg %p50
        %p149 = pneg %p81
        %p150 = pneg %p78
        %s151 = sand.u32 %s68, 1
        %s152 = scalar_lea.sflag [#allocation4], %s151
        %s153 = sand.u32 %s68, 1
        %s154 = smul.addr %s153, 64
        %s155 = scalar_lea.vmem [#allocation5], %s154
        %s156 = smul.u32 4, %s23
        %s157 = smul.u32 4, %s23
        %v158 = vld [vmem:[%s136] sm:$0xff]
        %v159 = vld [vmem:[%s136 + $0x8] sm:$0xff]
        %v160 = vld [vmem:[%s136 + $0x10] sm:$0xff]
        %v161 = vld [vmem:[%s136 + $0x18] sm:$0xff]
        %v162 = vld [vmem:[%s136 + $0x20] sm:$0xff]
        %v163 = vld [vmem:[%s136 + $0x28] sm:$0xff]
        %v164 = vld [vmem:[%s136 + $0x30] sm:$0xff]
        %v165 = vld [vmem:[%s136 + $0x38] sm:$0xff]
        %v166 = vxor.u32 %v158, 2147483648
        %v167 = vxor.u32 %v159, 2147483648
        %v168 = vxor.u32 %v160, 2147483648
        %v169 = vxor.u32 %v161, 2147483648
        %v170 = vxor.u32 %v162, 2147483648
        %v171 = vxor.u32 %v163, 2147483648
        %v172 = vxor.u32 %v164, 2147483648
        %v173 = vxor.u32 %v165, 2147483648
        %v174 = vmul.f32 %v166, 1.442695
        %v175 = vpow.pop %v174
        %v176 = vmul.f32 %v167, 1.442695
        %v177 = vpow.pop %v176
        %v178 = vmul.f32 %v168, 1.442695
        %v179 = vpow.pop %v178
        %v180 = vmul.f32 %v169, 1.442695
        %v181 = vpow.pop %v180
        %v182 = vmul.f32 %v170, 1.442695
        %v183 = vpow.pop %v182
        %v184 = vmul.f32 %v171, 1.442695
        %v185 = vpow.pop %v184
        %v186 = vmul.f32 %v172, 1.442695
        %v187 = vpow.pop %v186
        %v188 = vmul.f32 %v173, 1.442695
        %v189 = vpow.pop %v188
        %v190 = vadd.f32 %v175, 1.0
        %v191 = vadd.f32 %v177, 1.0
        %v192 = vadd.f32 %v179, 1.0
        %v193 = vadd.f32 %v181, 1.0
        %v194 = vadd.f32 %v183, 1.0
        %v195 = vadd.f32 %v185, 1.0
        %v196 = vadd.f32 %v187, 1.0
        %v197 = vadd.f32 %v189, 1.0
        %v198 = vrcp.pop %v190
        %v199 = vmul.f32 %v190, %v198
        %v200 = vsub.f32 1.0, %v199
        %v201 = vmul.f32 %v198, %v200
        %v202 = vadd.f32 %v198, %v201
        %vm203 = vweird.f32 %v190
        %vm204 = vweird.f32 %v198
        %vm205 = vmor %vm203, %vm204
        %v206 = vsel %vm205, %v198, %v202
        %v207 = vand.u32 2147483647, %v190
        %vm208 = vcmp.eq.f32.partialorder %v207, 8.507059e+37
        %v209 = vand.u32 %v190, 2147483648
        %v210 = vor.u32 1.1754944e-38, %v209
        %v211 = vsel %vm208, %v210, %v206
        %v212 = vmul.f32 1.0, %v211
        %v213 = vrcp.pop %v191
        %v214 = vmul.f32 %v191, %v213
        %v215 = vsub.f32 1.0, %v214
        %v216 = vmul.f32 %v213, %v215
        %v217 = vadd.f32 %v213, %v216
        %vm218 = vweird.f32 %v191
        %vm219 = vweird.f32 %v213
        %vm220 = vmor %vm218, %vm219
        %v221 = vsel %vm220, %v213, %v217
        %v222 = vand.u32 2147483647, %v191
        %vm223 = vcmp.eq.f32.partialorder %v222, 8.507059e+37
        %v224 = vand.u32 %v191, 2147483648
        %v225 = vor.u32 1.1754944e-38, %v224
        %v226 = vsel %vm223, %v225, %v221
        %v227 = vmul.f32 1.0, %v226
        %v228 = vrcp.pop %v192
        %v229 = vmul.f32 %v192, %v228
        %v230 = vsub.f32 1.0, %v229
        %v231 = vmul.f32 %v228, %v230
        %v232 = vadd.f32 %v228, %v231
        %vm233 = vweird.f32 %v192
        %vm234 = vweird.f32 %v228
        %vm235 = vmor %vm233, %vm234
        %v236 = vsel %vm235, %v228, %v232
        %v237 = vand.u32 2147483647, %v192
        %vm238 = vcmp.eq.f32.partialorder %v237, 8.507059e+37
        %v239 = vand.u32 %v192, 2147483648
        %v240 = vor.u32 1.1754944e-38, %v239
        %v241 = vsel %vm238, %v240, %v236
        %v242 = vmul.f32 1.0, %v241
        %v243 = vrcp.pop %v193
        %v244 = vmul.f32 %v193, %v243
        %v245 = vsub.f32 1.0, %v244
        %v246 = vmul.f32 %v243, %v245
        %v247 = vadd.f32 %v243, %v246
        %vm248 = vweird.f32 %v193
        %vm249 = vweird.f32 %v243
        %vm250 = vmor %vm248, %vm249
        %v251 = vsel %vm250, %v243, %v247
        %v252 = vand.u32 2147483647, %v193
        %vm253 = vcmp.eq.f32.partialorder %v252, 8.507059e+37
        %v254 = vand.u32 %v193, 2147483648
        %v255 = vor.u32 1.1754944e-38, %v254
        %v256 = vsel %vm253, %v255, %v251
        %v257 = vmul.f32 1.0, %v256
        %v258 = vrcp.pop %v194
        %v259 = vmul.f32 %v194, %v258
        %v260 = vsub.f32 1.0, %v259
        %v261 = vmul.f32 %v258, %v260
        %v262 = vadd.f32 %v258, %v261
        %vm263 = vweird.f32 %v194
        %vm264 = vweird.f32 %v258
        %vm265 = vmor %vm263, %vm264
        %v266 = vsel %vm265, %v258, %v262
        %v267 = vand.u32 2147483647, %v194
        %vm268 = vcmp.eq.f32.partialorder %v267, 8.507059e+37
        %v269 = vand.u32 %v194, 2147483648
        %v270 = vor.u32 1.1754944e-38, %v269
        %v271 = vsel %vm268, %v270, %v266
        %v272 = vmul.f32 1.0, %v271
        %v273 = vrcp.pop %v195
        %v274 = vmul.f32 %v195, %v273
        %v275 = vsub.f32 1.0, %v274
        %v276 = vmul.f32 %v273, %v275
        %v277 = vadd.f32 %v273, %v276
        %vm278 = vweird.f32 %v195
        %vm279 = vweird.f32 %v273
        %vm280 = vmor %vm278, %vm279
        %v281 = vsel %vm280, %v273, %v277
        %v282 = vand.u32 2147483647, %v195
        %vm283 = vcmp.eq.f32.partialorder %v282, 8.507059e+37
        %v284 = vand.u32 %v195, 2147483648
        %v285 = vor.u32 1.1754944e-38, %v284
        %v286 = vsel %vm283, %v285, %v281
        %v287 = vmul.f32 1.0, %v286
        %v288 = vrcp.pop %v196
        %v289 = vmul.f32 %v196, %v288
        %v290 = vsub.f32 1.0, %v289
        %v291 = vmul.f32 %v288, %v290
        %v292 = vadd.f32 %v288, %v291
        %vm293 = vweird.f32 %v196
        %vm294 = vweird.f32 %v288
        %vm295 = vmor %vm293, %vm294
        %v296 = vsel %vm295, %v288, %v292
        %v297 = vand.u32 2147483647, %v196
        %vm298 = vcmp.eq.f32.partialorder %v297, 8.507059e+37
        %v299 = vand.u32 %v196, 2147483648
        %v300 = vor.u32 1.1754944e-38, %v299
        %v301 = vsel %vm298, %v300, %v296
        %v302 = vmul.f32 1.0, %v301
        %v303 = vrcp.pop %v197
        %v304 = vmul.f32 %v197, %v303
        %v305 = vsub.f32 1.0, %v304
        %v306 = vmul.f32 %v303, %v305
        %v307 = vadd.f32 %v303, %v306
        %vm308 = vweird.f32 %v197
        %vm309 = vweird.f32 %v303
        %vm310 = vmor %vm308, %vm309
        %v311 = vsel %vm310, %v303, %v307
        %v312 = vand.u32 2147483647, %v197
        %vm313 = vcmp.eq.f32.partialorder %v312, 8.507059e+37
        %v314 = vand.u32 %v197, 2147483648
        %v315 = vor.u32 1.1754944e-38, %v314
        %v316 = vsel %vm313, %v315, %v311
        %v317 = vmul.f32 1.0, %v316
        %v318 = vmax.f32 %v212, 0.0001
        %v319 = vmax.f32 %v227, 0.0001
        %v320 = vmax.f32 %v242, 0.0001
        %v321 = vmax.f32 %v257, 0.0001
        %v322 = vmax.f32 %v272, 0.0001
        %v323 = vmax.f32 %v287, 0.0001
        %v324 = vmax.f32 %v302, 0.0001
        %v325 = vmax.f32 %v317, 0.0001
        %v326 = vmin.f32 %v318, 0.9999
        %v327 = vmin.f32 %v319, 0.9999
        %v328 = vmin.f32 %v320, 0.9999
        %v329 = vmin.f32 %v321, 0.9999
        %v330 = vmin.f32 %v322, 0.9999
        %v331 = vmin.f32 %v323, 0.9999
        %v332 = vmin.f32 %v324, 0.9999
        %v333 = vmin.f32 %v325, 0.9999
        %v334 = vlaneseq
        %v335 = vshrl.u32 %v334, 7
        %v336 = vadd.s32 %v335, 8
        %v337 = vadd.s32 %v335, 16
        %v338 = vadd.s32 %v335, 24
        %v339 = vadd.s32 %v335, 32
        %v340 = vadd.s32 %v335, 40
        %v341 = vadd.s32 %v335, 48
        %v342 = vadd.s32 %v335, 56
        %vm343 = vcmp.lt.s32.totalorder %v335, 0
        %v344 = vsub.s32 0, %v335
        %v345 = vsel %vm343, %v344, %v335
        %v346 = vshrl.u32 %v345, 4
        %v347 = vand.u32 %v345, 15
        %v348 = vsub.s32 0, %v347
        %v349 = vsel %vm343, %v348, %v347
        %vm350 = vcmp.lt.s32.totalorder %v336, 0
        %v351 = vsub.s32 0, %v336
        %v352 = vsel %vm350, %v351, %v336
        %v353 = vshrl.u32 %v352, 4
        %v354 = vand.u32 %v352, 15
        %v355 = vsub.s32 0, %v354
        %v356 = vsel %vm350, %v355, %v354
        %vm357 = vcmp.lt.s32.totalorder %v337, 0
        %v358 = vsub.s32 0, %v337
        %v359 = vsel %vm357, %v358, %v337
        %v360 = vshrl.u32 %v359, 4
        %v361 = vand.u32 %v359, 15
        %v362 = vsub.s32 0, %v361
        %v363 = vsel %vm357, %v362, %v361
        %vm364 = vcmp.lt.s32.totalorder %v338, 0
        %v365 = vsub.s32 0, %v338
        %v366 = vsel %vm364, %v365, %v338
        %v367 = vshrl.u32 %v366, 4
        %v368 = vand.u32 %v366, 15
        %v369 = vsub.s32 0, %v368
        %v370 = vsel %vm364, %v369, %v368
        %vm371 = vcmp.lt.s32.totalorder %v339, 0
        %v372 = vsub.s32 0, %v339
        %v373 = vsel %vm371, %v372, %v339
        %v374 = vshrl.u32 %v373, 4
        %v375 = vand.u32 %v373, 15
        %v376 = vsub.s32 0, %v375
        %v377 = vsel %vm371, %v376, %v375
        %vm378 = vcmp.lt.s32.totalorder %v340, 0
        %v379 = vsub.s32 0, %v340
        %v380 = vsel %vm378, %v379, %v340
        %v381 = vshrl.u32 %v380, 4
        %v382 = vand.u32 %v380, 15
        %v383 = vsub.s32 0, %v382
        %v384 = vsel %vm378, %v383, %v382
        %vm385 = vcmp.lt.s32.totalorder %v341, 0
        %v386 = vsub.s32 0, %v341
        %v387 = vsel %vm385, %v386, %v341
        %v388 = vshrl.u32 %v387, 4
        %v389 = vand.u32 %v387, 15
        %v390 = vsub.s32 0, %v389
        %v391 = vsel %vm385, %v390, %v389
        %vm392 = vcmp.lt.s32.totalorder %v342, 0
        %v393 = vsub.s32 0, %v342
        %v394 = vsel %vm392, %v393, %v342
        %v395 = vshrl.u32 %v394, 4
        %v396 = vand.u32 %v394, 15
        %v397 = vsub.s32 0, %v396
        %v398 = vsel %vm392, %v397, %v396
        %vm399 = vcmp.ne.s32.totalorder %v349, 0
        %vm400 = vcmp.ne.s32.totalorder %v356, 0
        %vm401 = vcmp.ne.s32.totalorder %v363, 0
        %vm402 = vcmp.ne.s32.totalorder %v370, 0
        %vm403 = vcmp.ne.s32.totalorder %v377, 0
        %vm404 = vcmp.ne.s32.totalorder %v384, 0
        %vm405 = vcmp.ne.s32.totalorder %v391, 0
        %vm406 = vcmp.ne.s32.totalorder %v398, 0
        %vm407 = vcmp.lt.s32.totalorder %v349, 0
        %vm408 = vcmp.lt.s32.totalorder %v356, 0
        %vm409 = vcmp.lt.s32.totalorder %v363, 0
        %vm410 = vcmp.lt.s32.totalorder %v370, 0
        %vm411 = vcmp.lt.s32.totalorder %v377, 0
        %vm412 = vcmp.lt.s32.totalorder %v384, 0
        %vm413 = vcmp.lt.s32.totalorder %v391, 0
        %vm414 = vcmp.lt.s32.totalorder %v398, 0
        %vm415 = vmand %vm407, %vm399
        %vm416 = vmand %vm408, %vm400
        %vm417 = vmand %vm409, %vm401
        %vm418 = vmand %vm410, %vm402
        %vm419 = vmand %vm411, %vm403
        %vm420 = vmand %vm412, %vm404
        %vm421 = vmand %vm413, %vm405
        %vm422 = vmand %vm414, %vm406
        %v423 = vadd.s32 %v349, 16
        %v424 = vadd.s32 %v356, 16
        %v425 = vadd.s32 %v363, 16
        %v426 = vadd.s32 %v370, 16
        %v427 = vadd.s32 %v377, 16
        %v428 = vadd.s32 %v384, 16
        %v429 = vadd.s32 %v391, 16
        %v430 = vadd.s32 %v398, 16
        %v431 = vsel %vm415, %v423, %v349
        %v432 = vsel %vm416, %v424, %v356
        %v433 = vsel %vm417, %v425, %v363
        %v434 = vsel %vm418, %v426, %v370
        %v435 = vsel %vm419, %v427, %v377
        %v436 = vsel %vm420, %v428, %v384
        %v437 = vsel %vm421, %v429, %v391
        %v438 = vsel %vm422, %v430, %v398
        %v439 = vlaneseq
        %v440 = vand.u32 %v439, 127
        %vm441 = vcmp.lt.s32.totalorder %v431, 15
        %vm442 = vcmp.lt.s32.totalorder %v432, 15
        %vm443 = vcmp.lt.s32.totalorder %v433, 15
        %vm444 = vcmp.lt.s32.totalorder %v434, 15
        %vm445 = vcmp.lt.s32.totalorder %v435, 15
        %vm446 = vcmp.lt.s32.totalorder %v436, 15
        %vm447 = vcmp.lt.s32.totalorder %v437, 15
        %vm448 = vcmp.lt.s32.totalorder %v438, 15
        %v449 = vrot.slane %v326, 1
        %v450 = vrot.slane %v327, 1
        %v451 = vrot.slane %v328, 1
        %v452 = vrot.slane %v329, 1
        %v453 = vrot.slane %v330, 1
        %v454 = vrot.slane %v331, 1
        %v455 = vrot.slane %v332, 1
        %v456 = vrot.slane %v333, 1
        %vm457 = vcmp.lt.s32.totalorder %v335, 7
        %v458 = vsel %vm457, %v455, %v456
        %v459 = vsel %vm457, %v454, %v455
        %v460 = vsel %vm457, %v453, %v454
        %v461 = vsel %vm457, %v452, %v453
        %v462 = vsel %vm457, %v451, %v452
        %v463 = vsel %vm457, %v450, %v451
        %v464 = vsel %vm457, %v449, %v450
        %v465 = vsel %vm457, %v456, %v449
        %v466 = vsel %vm441, %v464, 0.0
        %v467 = vsel %vm442, %v463, 0.0
        %v468 = vsel %vm443, %v462, 0.0
        %v469 = vsel %vm444, %v461, 0.0
        %v470 = vsel %vm445, %v460, 0.0
        %v471 = vsel %vm446, %v459, 0.0
        %v472 = vsel %vm447, %v458, 0.0
        %v473 = vsel %vm448, %v465, 0.0
        %vm474 = vcmp.gt.s32.totalorder %v431, 0
        %vm475 = vcmp.gt.s32.totalorder %v432, 0
        %vm476 = vcmp.gt.s32.totalorder %v433, 0
        %vm477 = vcmp.gt.s32.totalorder %v434, 0
        %vm478 = vcmp.gt.s32.totalorder %v435, 0
        %vm479 = vcmp.gt.s32.totalorder %v436, 0
        %vm480 = vcmp.gt.s32.totalorder %v437, 0
        %vm481 = vcmp.gt.s32.totalorder %v438, 0
        %v482 = vrot.slane %v326, 7
        %v483 = vrot.slane %v327, 7
        %v484 = vrot.slane %v328, 7
        %v485 = vrot.slane %v329, 7
        %v486 = vrot.slane %v330, 7
        %v487 = vrot.slane %v331, 7
        %v488 = vrot.slane %v332, 7
        %v489 = vrot.slane %v333, 7
        %vm490 = vcmp.lt.s32.totalorder %v335, 1
        %v491 = vsel %vm490, %v488, %v489
        %v492 = vsel %vm490, %v487, %v488
        %v493 = vsel %vm490, %v486, %v487
        %v494 = vsel %vm490, %v485, %v486
        %v495 = vsel %vm490, %v484, %v485
        %v496 = vsel %vm490, %v483, %v484
        %v497 = vsel %vm490, %v482, %v483
        %v498 = vsel %vm490, %v489, %v482
        %v499 = vsel %vm474, %v498, 0.0
        %v500 = vsel %vm475, %v497, 0.0
        %v501 = vsel %vm476, %v496, 0.0
        %v502 = vsel %vm477, %v495, 0.0
        %v503 = vsel %vm478, %v494, 0.0
        %v504 = vsel %vm479, %v493, 0.0
        %v505 = vsel %vm480, %v492, 0.0
        %v506 = vsel %vm481, %v491, 0.0
        %v507 = vmax.f32 %v466, %v499
        %v508 = vmax.f32 %v467, %v500
        %v509 = vmax.f32 %v468, %v501
        %v510 = vmax.f32 %v469, %v502
        %v511 = vmax.f32 %v470, %v503
        %v512 = vmax.f32 %v471, %v504
        %v513 = vmax.f32 %v472, %v505
        %v514 = vmax.f32 %v473, %v506
        %v515 = vmax.f32 %v326, %v507
        %v516 = vmax.f32 %v327, %v508
        %v517 = vmax.f32 %v328, %v509
        %v518 = vmax.f32 %v329, %v510
        %v519 = vmax.f32 %v330, %v511
        %v520 = vmax.f32 %v331, %v512
        %v521 = vmax.f32 %v332, %v513
        %v522 = vmax.f32 %v333, %v514
        %vm523 = vcmp.lt.s32.totalorder %v440, 15
        %vm524 = vcmask 1047680
        %525 = vrot.lane.b32.xlu0 %v515, 16
        %v526 = vpop.permute.xlu0 %525
        %v527 = vsel %vm524, %v526, %v515
        %528 = vrot.lane.b32.xlu0 %v516, 16
        %v529 = vpop.permute.xlu0 %528
        %v530 = vsel %vm524, %v529, %v516
        %531 = vrot.lane.b32.xlu0 %v517, 16
        %v532 = vpop.permute.xlu0 %531
        %v533 = vsel %vm524, %v532, %v517
        %534 = vrot.lane.b32.xlu0 %v518, 16
        %v535 = vpop.permute.xlu0 %534
        %v536 = vsel %vm524, %v535, %v518
        %537 = vrot.lane.b32.xlu0 %v519, 16
        %v538 = vpop.permute.xlu0 %537
        %v539 = vsel %vm524, %v538, %v519
        %540 = vrot.lane.b32.xlu0 %v520, 16
        %v541 = vpop.permute.xlu0 %540
        %v542 = vsel %vm524, %v541, %v520
        %543 = vrot.lane.b32.xlu0 %v521, 16
        %v544 = vpop.permute.xlu0 %543
        %v545 = vsel %vm524, %v544, %v521
        %546 = vrot.lane.b32.xlu0 %v522, 16
        %v547 = vpop.permute.xlu0 %546
        %v548 = vsel %vm524, %v547, %v522
        %549 = vrot.lane.b32.xlu0 %v527, 16
        %v550 = vpop.permute.xlu0 %549
        %551 = vrot.lane.b32.xlu0 %v530, 16
        %v552 = vpop.permute.xlu0 %551
        %553 = vrot.lane.b32.xlu0 %v533, 16
        %v554 = vpop.permute.xlu0 %553
        %555 = vrot.lane.b32.xlu0 %v536, 16
        %v556 = vpop.permute.xlu0 %555
        %557 = vrot.lane.b32.xlu0 %v539, 16
        %v558 = vpop.permute.xlu0 %557
        %559 = vrot.lane.b32.xlu0 %v542, 16
        %v560 = vpop.permute.xlu0 %559
        %561 = vrot.lane.b32.xlu0 %v545, 16
        %v562 = vpop.permute.xlu0 %561
        %563 = vrot.lane.b32.xlu0 %v548, 16
        %v564 = vpop.permute.xlu0 %563
        %v565 = vsel %vm524, %v550, %v515
        %v566 = vsel %vm524, %v552, %v516
        %v567 = vsel %vm524, %v554, %v517
        %v568 = vsel %vm524, %v556, %v518
        %v569 = vsel %vm524, %v558, %v519
        %v570 = vsel %vm524, %v560, %v520
        %v571 = vsel %vm524, %v562, %v521
        %v572 = vsel %vm524, %v564, %v522
        %581 = vrot.lane.b32.xlu0 %v565, 127
        %v582 = vpop.permute.xlu0 %581
        %583 = vrot.lane.b32.xlu0 %v566, 127
        %v584 = vpop.permute.xlu0 %583
        %585 = vrot.lane.b32.xlu0 %v567, 127
        %v586 = vpop.permute.xlu0 %585
        %587 = vrot.lane.b32.xlu0 %v568, 127
        %v588 = vpop.permute.xlu0 %587
        %589 = vrot.lane.b32.xlu0 %v569, 127
        %v590 = vpop.permute.xlu0 %589
        %591 = vrot.lane.b32.xlu0 %v570, 127
        %v592 = vpop.permute.xlu0 %591
        %593 = vrot.lane.b32.xlu0 %v571, 127
        %v594 = vpop.permute.xlu0 %593
        %595 = vrot.lane.b32.xlu0 %v572, 127
        %v596 = vpop.permute.xlu0 %595
        %v605 = vsel %vm523, %v582, 0.0
        %v606 = vsel %vm523, %v584, 0.0
        %v607 = vsel %vm523, %v586, 0.0
        %v608 = vsel %vm523, %v588, 0.0
        %v609 = vsel %vm523, %v590, 0.0
        %v610 = vsel %vm523, %v592, 0.0
        %v611 = vsel %vm523, %v594, 0.0
        %v612 = vsel %vm523, %v596, 0.0
        %vm613 = vcmp.gt.s32.totalorder %v440, 0
        %614 = vrot.lane.b32.xlu0 %v565, 113
        %v615 = vpop.permute.xlu0 %614
        %616 = vrot.lane.b32.xlu0 %v566, 113
        %v617 = vpop.permute.xlu0 %616
        %618 = vrot.lane.b32.xlu0 %v567, 113
        %v619 = vpop.permute.xlu0 %618
        %620 = vrot.lane.b32.xlu0 %v568, 113
        %v621 = vpop.permute.xlu0 %620
        %622 = vrot.lane.b32.xlu0 %v569, 113
        %v623 = vpop.permute.xlu0 %622
        %624 = vrot.lane.b32.xlu0 %v570, 113
        %v625 = vpop.permute.xlu0 %624
        %626 = vrot.lane.b32.xlu0 %v571, 113
        %v627 = vpop.permute.xlu0 %626
        %628 = vrot.lane.b32.xlu0 %v572, 113
        %v629 = vpop.permute.xlu0 %628
        %v638 = vsel %vm613, %v615, 0.0
        %v639 = vsel %vm613, %v617, 0.0
        %v640 = vsel %vm613, %v619, 0.0
        %v641 = vsel %vm613, %v621, 0.0
        %v642 = vsel %vm613, %v623, 0.0
        %v643 = vsel %vm613, %v625, 0.0
        %v644 = vsel %vm613, %v627, 0.0
        %v645 = vsel %vm613, %v629, 0.0
        %v646 = vmax.f32 %v605, %v638
        %v647 = vmax.f32 %v606, %v639
        %v648 = vmax.f32 %v607, %v640
        %v649 = vmax.f32 %v608, %v641
        %v650 = vmax.f32 %v609, %v642
        %v651 = vmax.f32 %v610, %v643
        %v652 = vmax.f32 %v611, %v644
        %v653 = vmax.f32 %v612, %v645
        %v654 = vmax.f32 %v515, %v646
        %v655 = vmax.f32 %v516, %v647
        %v656 = vmax.f32 %v517, %v648
        %v657 = vmax.f32 %v518, %v649
        %v658 = vmax.f32 %v519, %v650
        %v659 = vmax.f32 %v520, %v651
        %v660 = vmax.f32 %v521, %v652
        %v661 = vmax.f32 %v522, %v653
        %vm662 = vcmp.eq.f32.partialorder %v654, %v326
        %vm663 = vcmp.eq.f32.partialorder %v655, %v327
        %vm664 = vcmp.eq.f32.partialorder %v656, %v328
        %vm665 = vcmp.eq.f32.partialorder %v657, %v329
        %vm666 = vcmp.eq.f32.partialorder %v658, %v330
        %vm667 = vcmp.eq.f32.partialorder %v659, %v331
        %vm668 = vcmp.eq.f32.partialorder %v660, %v332
        %vm669 = vcmp.eq.f32.partialorder %v661, %v333
        %v670 = vsel %vm662, 1, 0
        %v671 = vsel %vm663, 1, 0
        %v672 = vsel %vm664, 1, 0
        %v673 = vsel %vm665, 1, 0
        %v674 = vsel %vm666, 1, 0
        %v675 = vsel %vm667, 1, 0
        %v676 = vsel %vm668, 1, 0
        %v677 = vsel %vm669, 1, 0
        %v678 = vcvt.s32.f32 %v670
        %v679 = vcvt.s32.f32 %v671
        %v680 = vcvt.s32.f32 %v672
        %v681 = vcvt.s32.f32 %v673
        %v682 = vcvt.s32.f32 %v674
        %v683 = vcvt.s32.f32 %v675
        %v684 = vcvt.s32.f32 %v676
        %v685 = vcvt.s32.f32 %v677
        %v686 = vmul.f32 %v326, %v678
        %v687 = vmul.f32 %v327, %v679
        %v688 = vmul.f32 %v328, %v680
        %v689 = vmul.f32 %v329, %v681
        %v690 = vmul.f32 %v330, %v682
        %v691 = vmul.f32 %v331, %v683
        %v692 = vmul.f32 %v332, %v684
        %v693 = vmul.f32 %v333, %v685
        %vm694 = vcmask 130048
        %695 = vst.msk [vmem:[%s155] sm:$0xff] %vm694, %v686
        %696 = vst.msk [vmem:[%s155 + $0x8] sm:$0xff] %vm694, %v687
        %697 = vst.msk [vmem:[%s155 + $0x10] sm:$0xff] %vm694, %v688
        %698 = vst.msk [vmem:[%s155 + $0x18] sm:$0xff] %vm694, %v689
        %699 = vst.msk [vmem:[%s155 + $0x20] sm:$0xff] %vm694, %v690
        %700 = vst.msk [vmem:[%s155 + $0x28] sm:$0xff] %vm694, %v691
        %701 = vst.msk [vmem:[%s155 + $0x30] sm:$0xff] %vm694, %v692
        %702 = vst.msk [vmem:[%s155 + $0x38] sm:$0xff] %vm694, %v693
        %s703 = sand.u32 %s68, 1
        %s704 = scalar_lea.sflag [#allocation4], %s703
        %s705 = sand.u32 %s68, 1
        %s706 = smul.addr %s705, 64
        %s707 = scalar_lea.vmem [#allocation5], %s706
        // Predicated region
        $region29: #{tpu_custom_call.1} parent=23 // pred_check
          %p708 = pneg %p78
        $region30: #{tpu_custom_call.1} parent=23 // pred_check_branch
          %710 = sbr.rel (%p708) target = $region32
        $region31: #{tpu_custom_call.1} parent=23 // pred_region
          %s711 = smul.u32 4, %s23
          %713 = vsyncadd %s704, 0
          %s714 = smul.addr %s711, 2
          %s715 = smul.addr %s22, 8
          %s716 = sadd.s32 %s714, %s715
          %s717 = smul.addr %s716, 8
          %s718 = scalar_lea.hbm %s1, %s717
          %s719 = sshll.u32 %s707, 4
          %s720 = int_to_ptr.vmem [resolvable:$true] %s719
          %s721 = sshll.u32 %s718, 4
          %s722 = int_to_ptr.hbm [resolvable:$true] %s721
          %727 = dma.vmem_to_hbm [thread:$0]  %s720, 1024, %s722, %s704, 128, 128, 8
        $region32: #{tpu_custom_call.1} parent=23 // pred_fallthru
          _
      $region24: #{tpu_custom_call.1} parent=5 // pred_fallthru
        _
      %p728 = scmp.le.s32.totalorder 2, %s13
      // Predicated region
      $region33: #{tpu_custom_call.1} parent=5 // pred_check
        %p729 = pneg %p728
      $region34: #{tpu_custom_call.1} parent=5 // pred_check_branch
        %731 = sbr.rel (%p729) target = $region36
      $region35: #{tpu_custom_call.1} parent=5 // pred_region
        %s732 = ssub.s32 %s13, 2
        // Predicated region
        $region37: #{tpu_custom_call.1} parent=35 // pred_check
          %p733 = pneg %p84
        $region38: #{tpu_custom_call.1} parent=35 // pred_check_branch
          %735 = sbr.rel (%p733) target = $region40
        $region39: #{tpu_custom_call.1} parent=35 // pred_region
          %s736 = sand.u32 %s69, 1
          %s737 = scalar_lea.sflag [#allocation4], %s736
          %s738 = sand.u32 %s69, 1
          %s739 = smul.addr %s738, 64
          %s740 = scalar_lea.vmem [#allocation5], %s739
          %742 = dma.done %s737, 1024
        $region40: #{tpu_custom_call.1} parent=35 // pred_fallthru
          _
      $region36: #{tpu_custom_call.1} parent=5 // pred_fallthru
        _
    $region6: #{tpu_custom_call.1} parent=1 // loop_footer
      %s17 = sadd.s32 1, %s13
    $region7: #{tpu_custom_call.1} parent=1 // loop_footer_branch
      %12 = sbr.rel target = $region3
    $region8: #{tpu_custom_call.1} parent=1 // loop_exit
      _
    %743 = vsyncpa [#allocation3], 1
    %s744 = scalar_lea.sflag [#allocation3], 1
    %745 = vsyncpa %s744, 1
    %746 = vsyncpa [#allocation4], 1
    %s747 = scalar_lea.sflag [#allocation4], 1
    %748 = vsyncpa %s747, 1

</llo_original>
